<compile_context>
chip_gen: v6e
topology: v6e:2x2x1
jax: 0.10.0
libtpu: 0.0.40
codegen_flags: <defaults>
</compile_context>

<pallas_src>
import jax
import jax.numpy as jnp
from jax.experimental import pallas as pl
from jax.experimental.pallas import tpu as pltpu


def _round_up(x, m):
    return (x + m - 1) // m * m


def _fused_gcn_kernel_acc(a_ref, x_ref, w_ref, o_ref, acc_ref):
    """Multi-step node reduction: f32 accumulator resident across the k axis."""
    k = pl.program_id(1)

    @pl.when(k == 0)
    def _init():
        acc_ref[...] = jnp.zeros_like(acc_ref)

    # pre_sup slab for this k tile of nodes: (tk, Din_p) @ (Din_p, Dout_p).
    psup = jnp.dot(x_ref[...], w_ref[...], preferred_element_type=jnp.float32)
    # A tile @ pre_sup tile, accumulated in f32.
    acc_ref[...] += jnp.dot(
        a_ref[...], psup.astype(a_ref.dtype), preferred_element_type=jnp.float32
    )

    @pl.when(k == pl.num_programs(1) - 1)
    def _finalize():
        o_ref[...] = jnp.maximum(acc_ref[...], 0.0).astype(o_ref.dtype)


def _fused_gcn_kernel_noacc(a_ref, x_ref, w_ref, o_ref):
    """Single reduction step: no scratch accumulator round-trip needed."""
    psup = jnp.dot(x_ref[...], w_ref[...], preferred_element_type=jnp.float32)
    out = jnp.dot(
        a_ref[...], psup.astype(a_ref.dtype), preferred_element_type=jnp.float32
    )
    o_ref[...] = jnp.maximum(out, 0.0).astype(o_ref.dtype)


def graph_convolution_forward(
    features, support, weight0, *, tm=128, tk=128, compute_dtype=jnp.bfloat16
):
    """Pallas equivalent of GraphConvolution.forward (dropout=0, no bias).

    relu(support @ (features @ weight0)), computed in one fused pallas_call.
    """
    n_nodes, d_in = features.shape
    dw_in, d_out = weight0.shape
    na, nb = support.shape
    assert d_in == dw_in and n_nodes == na == nb, (
        features.shape, support.shape, weight0.shape)
    assert tm % 8 == 0 and tk % 128 == 0, (tm, tk)

    # Zero-pad so every block is (8,128)-aligned and the output lane dim is a
    # multiple of 128 (lane-dense, unmasked stores).  Zero pads do not change
    # the result and are sliced off at the end.
    m_p = _round_up(n_nodes, tm)        # rows of A / rows of output
    k_p = _round_up(n_nodes, tk)        # cols of A == rows of x (reduction dim)
    din_p = _round_up(d_in, 128)
    dout_p = _round_up(d_out, 128)

    a_p = jnp.pad(support.astype(compute_dtype),
                  ((0, m_p - n_nodes), (0, k_p - n_nodes)))
    x_p = jnp.pad(features.astype(compute_dtype),
                  ((0, k_p - n_nodes), (0, din_p - d_in)))
    w_p = jnp.pad(weight0.astype(compute_dtype),
                  ((0, din_p - d_in), (0, dout_p - d_out)))

    n_i = m_p // tm
    n_k = k_p // tk

    if n_k == 1:
        kernel = _fused_gcn_kernel_noacc
        scratch_shapes = []
    else:
        kernel = _fused_gcn_kernel_acc
        scratch_shapes = [pltpu.VMEM((tm, dout_p), jnp.float32)]

    out_padded = pl.pallas_call(
        kernel,
        out_shape=jax.ShapeDtypeStruct((m_p, dout_p), jnp.float32),
        grid_spec=pltpu.PrefetchScalarGridSpec(
            num_scalar_prefetch=0,
            grid=(n_i, n_k),
            in_specs=[
                pl.BlockSpec((tm, tk), lambda i, k: (i, k)),         # A tile
                pl.BlockSpec((tk, din_p), lambda i, k: (k, 0)),      # x rows for this k
                pl.BlockSpec((din_p, dout_p), lambda i, k: (0, 0)),  # full W (resident)
            ],
            out_specs=pl.BlockSpec((tm, dout_p), lambda i, k: (i, 0)),
            scratch_shapes=scratch_shapes,
        ),
        compiler_params=pltpu.CompilerParams(
            dimension_semantics=("parallel", "arbitrary")
        ),
    )(a_p, x_p, w_p)

    return out_padded[:n_nodes, :d_out]
    # TODO(synk): sparse adjacency (sparse_inputs=True) and the
    # featureless=True / transform=False paths are not exercised by the
    # reference forward and are not implemented.


def glorot_init(key, shape):
    """Glorot & Bengio uniform init, matching the PyTorch module."""
    init_range = jnp.sqrt(6.0 / (shape[0] + shape[1]))
    return jax.random.uniform(
        key, shape, dtype=jnp.float32, minval=-init_range, maxval=init_range
    )


if __name__ == "__main__":
    # Small deterministic example consistent with the module's forward:
    # N nodes, input_dim features, output_dim hidden.
    N, D_IN, D_OUT = 256, 128, 64

    key = jax.random.PRNGKey(0)
    k_feat, k_adj, k_w = jax.random.split(key, 3)

    features = jax.random.normal(k_feat, (N, D_IN), dtype=jnp.float32)
    support = jax.random.uniform(k_adj, (N, N), dtype=jnp.float32)  # dense support
    weight0 = glorot_init(k_w, (D_IN, D_OUT))

    out = jax.block_until_ready(
        graph_convolution_forward(features, support, weight0)
    )
    assert out.shape == (N, D_OUT), out.shape

    # Reference mirroring the kernel's numerics (bf16 operands, f32 accumulate).
    bf16, f32 = jnp.bfloat16, jnp.float32
    pre = features.astype(bf16).astype(f32) @ weight0.astype(bf16).astype(f32)
    ref = jnp.maximum(
        support.astype(bf16).astype(f32) @ pre.astype(bf16).astype(f32), 0.0
    )
    assert jnp.allclose(out, ref, atol=1e-2, rtol=1e-2), float(
        jnp.max(jnp.abs(out - ref))
    )

    # Loose sanity check against pure-f32 math (bf16 inputs -> ~1% relative).
    ref_f32 = jnp.maximum(support @ (features @ weight0), 0.0)
    assert jnp.allclose(out, ref_f32, atol=2.0, rtol=0.1), float(
        jnp.max(jnp.abs(out - ref_f32))
    )

    print("KERNEL_OK")
</pallas_src>

<mosaic_0001>
module attributes {stable_mosaic.version = 11 : i64} {
  func.func @_fused_gcn_kernel_acc(%arg0: i32, %arg1: i32, %arg2: memref<128x128xbf16, #tpu.memory_space<vmem>>, %arg3: memref<128x128xbf16, #tpu.memory_space<vmem>>, %arg4: memref<128x128xbf16, #tpu.memory_space<vmem>>, %arg5: memref<128x128xf32, #tpu.memory_space<vmem>>, %arg6: memref<128x128xf32, #tpu.memory_space<vmem>>) attributes {dimension_semantics = [#tpu.dimension_semantics<parallel>, #tpu.dimension_semantics<arbitrary>], iteration_bounds = array<i64: 2, 2>, scalar_prefetch = 0 : i64, scratch_operands = 1 : i64, tpu.core_type = #tpu.core_type<tc>, window_params = [{transform_indices = @transform_0, window_bounds = array<i64: 128, 128>}, {transform_indices = @transform_1, window_bounds = array<i64: 128, 128>}, {pipeline_mode = #tpu.pipeline_mode<synchronous>, transform_indices = @transform_2, window_bounds = array<i64: 128, 128>}, {transform_indices = @transform_3, window_bounds = array<i64: 128, 128>}]} {
    %c0_i32 = arith.constant 0 : i32
    %0 = arith.cmpi eq, %arg1, %c0_i32 : i32
    %1 = arith.extui %0 : i1 to i32
    %c0_i32_0 = arith.constant 0 : i32
    %2 = arith.cmpi ne, %1, %c0_i32_0 : i32
    scf.if %2 {
      %cst_12 = arith.constant 0.000000e+00 : f32
      %15 = vector.broadcast %cst_12 : f32 to vector<128x128xf32>
      %c0_13 = arith.constant 0 : index
      %c0_14 = arith.constant 0 : index
      %16 = vector.load %arg6[%c0_13, %c0_14] : memref<128x128xf32, #tpu.memory_space<vmem>>, vector<128x128xf32>
      tpu.vector_store %arg6[%c0_13, %c0_14], %15 {strides = array<i32>} : memref<128x128xf32, #tpu.memory_space<vmem>>, vector<128x128xf32>,
    } else {
    }
    %c0 = arith.constant 0 : index
    %c0_1 = arith.constant 0 : index
    %3 = vector.load %arg3[%c0, %c0_1] : memref<128x128xbf16, #tpu.memory_space<vmem>>, vector<128x128xbf16>
    %c0_2 = arith.constant 0 : index
    %c0_3 = arith.constant 0 : index
    %4 = vector.load %arg4[%c0_2, %c0_3] : memref<128x128xbf16, #tpu.memory_space<vmem>>, vector<128x128xbf16>
    %cst = arith.constant dense<0.000000e+00> : vector<128x128xf32>
    %5 = tpu.matmul %3, %4, %cst {dimension_numbers = #tpu.dot_dimension_numbers<[1], [0], [0], [1], [0, 0, 1, 1], [], []>} : vector<128x128xbf16>, vector<128x128xbf16>, vector<128x128xf32> -> vector<128x128xf32>
    %c0_4 = arith.constant 0 : index
    %c0_5 = arith.constant 0 : index
    %6 = vector.load %arg6[%c0_4, %c0_5] : memref<128x128xf32, #tpu.memory_space<vmem>>, vector<128x128xf32>
    %c0_6 = arith.constant 0 : index
    %c0_7 = arith.constant 0 : index
    %7 = vector.load %arg2[%c0_6, %c0_7] : memref<128x128xbf16, #tpu.memory_space<vmem>>, vector<128x128xbf16>
    %8 = arith.truncf %5 : vector<128x128xf32> to vector<128x128xbf16>
    %cst_8 = arith.constant dense<0.000000e+00> : vector<128x128xf32>
    %9 = tpu.matmul %7, %8, %cst_8 {dimension_numbers = #tpu.dot_dimension_numbers<[1], [0], [0], [1], [0, 0, 1, 1], [], []>} : vector<128x128xbf16>, vector<128x128xbf16>, vector<128x128xf32> -> vector<128x128xf32>
    %10 = arith.addf %6, %9 : vector<128x128xf32>
    %c0_9 = arith.constant 0 : index
    %c0_10 = arith.constant 0 : index
    %11 = vector.load %arg6[%c0_9, %c0_10] : memref<128x128xf32, #tpu.memory_space<vmem>>, vector<128x128xf32>
    tpu.vector_store %arg6[%c0_9, %c0_10], %10 {strides = array<i32>} : memref<128x128xf32, #tpu.memory_space<vmem>>, vector<128x128xf32>,
    %c1_i32 = arith.constant 1 : i32
    %12 = arith.cmpi eq, %arg1, %c1_i32 : i32
    %13 = arith.extui %12 : i1 to i32
    %c0_i32_11 = arith.constant 0 : i32
    %14 = arith.cmpi ne, %13, %c0_i32_11 : i32
    scf.if %14 {
      %c0_12 = arith.constant 0 : index
      %c0_13 = arith.constant 0 : index
      %15 = vector.load %arg6[%c0_12, %c0_13] : memref<128x128xf32, #tpu.memory_space<vmem>>, vector<128x128xf32>
      %cst_14 = arith.constant 0.000000e+00 : f32
      %16 = vector.broadcast %cst_14 : f32 to vector<128x128xf32>
      %17 = arith.maximumf %15, %16 : vector<128x128xf32>
      %c0_15 = arith.constant 0 : index
      %c0_16 = arith.constant 0 : index
      %18 = vector.load %arg5[%c0_15, %c0_16] : memref<128x128xf32, #tpu.memory_space<vmem>>, vector<128x128xf32>
      tpu.vector_store %arg5[%c0_15, %c0_16], %17 {strides = array<i32>} : memref<128x128xf32, #tpu.memory_space<vmem>>, vector<128x128xf32>,
    } else {
    }
    return
  }
  func.func @transform_0(%arg0: i32, %arg1: i32) -> (i32, i32) {
    %c0_i32 = arith.constant 0 : i32
    return %arg0, %arg1 : i32, i32
  }
  func.func @transform_1(%arg0: i32, %arg1: i32) -> (i32, i32) {
    %c0_i32 = arith.constant 0 : i32
    %c0_i32_0 = arith.constant 0 : i32
    return %arg1, %c0_i32 : i32, i32
  }
  func.func @transform_2(%arg0: i32, %arg1: i32) -> (i32, i32) {
    %c0_i32 = arith.constant 0 : i32
    %c0_i32_0 = arith.constant 0 : i32
    %c0_i32_1 = arith.constant 0 : i32
    return %c0_i32, %c0_i32_0 : i32, i32
  }
  func.func @transform_3(%arg0: i32, %arg1: i32) -> (i32, i32) {
    %c0_i32 = arith.constant 0 : i32
    %c0_i32_0 = arith.constant 0 : i32
    return %arg0, %c0_i32 : i32, i32
  }
}

</mosaic_0001>

<llo_original>
// kernel: tpu_custom_call.1
$region0: #{tpu_custom_call.1}
  #allocation0 [shape = 'u32[]', space=smem, size = 0x4, offset = 0x4, fixed_abs, tag = 'smem constant byte address 0x4 - core index']
  #allocation1 [shape = 'u32[144,128]{1,0:T(1,128)}', space=vmem, size = 0x12000, scoped, tag = 'internal scratch']
  #allocation2 [shape = 'f32[128,128]{1,0:T(8,128)}', space=vmem, size = 0x10000, scoped, tag = 'scratch operand']
  %s0 = inlined_call_operand.hbm [shape: bf16[256,256], index: 0, kind: input, shape index: {}]
  %s1 = inlined_call_operand.hbm [shape: bf16[256,128], index: 1, kind: input, shape index: {}]
  %s2 = inlined_call_operand.hbm [shape: bf16[128,128], index: 2, kind: input, shape index: {}]
  %s3 = inlined_call_operand.hbm [shape: f32[256,128], index: 3, kind: output, shape index: {}]
  %s4 = sld [smem:[#allocation0]]
  $region65: #{tpu_custom_call.1} parent=0
    _
  %s6 = ssub.s32 1, %s4
  %s7 = scalar_select 0, %s6, %s4
  $region1: #{tpu_custom_call.1} parent=0
    #allocation3 [shape = 'u8[65536]{0}', space=vmem, size = 0x10000, scoped, tag = 'input window, operand 0']
    #allocation4 [shape = 's32[2]{0}', space=sflag, size = 0x8, scoped, tag = 'scoped memory for tpu_custom_call.1']
    #allocation5 [shape = 's32[2]{0}', space=sflag, size = 0x8, scoped, tag = 'scoped memory for tpu_custom_call.1']
    #allocation6 [shape = 'u8[65536]{0}', space=vmem, size = 0x10000, scoped, tag = 'input window, operand 1']
    #allocation7 [shape = 's32[2]{0}', space=sflag, size = 0x8, scoped, tag = 'scoped memory for tpu_custom_call.1']
    #allocation8 [shape = 'u8[32768]{0}', space=vmem, size = 0x8000, scoped, tag = 'input window, operand 2, single buffered']
    #allocation9 [shape = 'u8[131072]{0}', space=vmem, size = 0x20000, scoped, tag = 'output window, operand 0']
    %8 = vsyncpa [#allocation4], 0
    %s9 = scalar_lea.sflag [#allocation4], 1
    %10 = vsyncpa %s9, 0
    %11 = vsyncpa [#allocation7], 0
    %s12 = scalar_lea.sflag [#allocation7], 1
    %13 = vsyncpa %s12, 0
    %14 = vsyncpa [#allocation5], 0
    %s15 = scalar_lea.sflag [#allocation5], 1
    %16 = vsyncpa %s15, 0
    loop: start=0, step=1, limit=6
    $region2: #{tpu_custom_call.1} parent=1 // loop_pre_header
      _
    $region3: #{tpu_custom_call.1} parent=1 // loop_header
      %s18 = sphi 0, %s22
      %p19 = scmp.ge.s32.totalorder %s18, 6
      %s25 = sphi 0, %s37
      %s26 = sphi 0, %s33
      %s27 = sphi 0, %s25
      %s28 = sphi 0, %s26
      %s29 = sphi 0, %s27
      %s30 = sphi 0, %s28
      %s42 = sphi 0, %s44
      %s45 = sphi 0, %s42
      %s46 = sphi 0, %s45
      %s62 = sphi 0, %s46
      %s68 = sphi 0, %s70
      %s71 = sphi 0, %s68
      %s72 = sphi 0, %s71
      %s88 = sphi 0, %s72
      %s92 = sphi 0, %s92
      %s94 = sphi 0, %s92
      %s95 = sphi 0, %s94
      %s109 = sphi 0, %s95
      %s115 = sphi 0, %s117
      %s118 = sphi 0, %s115
      %s119 = sphi 0, %s118
      %s135 = sphi 0, %s119
    $region4: #{tpu_custom_call.1} parent=1 // loop_header_branch
      %21 = sbr.rel (%p19) target = $region8
    $region5: #{tpu_custom_call.1} parent=1 // loop_body
      %s23 = ssub.s32 %s18, 1
      %s24 = ssub.s32 %s18, 2
      %s31 = sadd.s32 1, %s26
      %p32 = scmp.ge.s32.totalorder %s31, 2
      %s33 = scalar_select %p32, 0, %s31
      %s34 = sadd.s32 1, %s25
      %s35 = scalar_select %p32, %s34, %s25
      %p36 = scmp.ge.s32.totalorder %s35, 2
      %s37 = scalar_select %p36, 0, %s35
      %s38 = ssub.s32 %s25, %s37
      %s39 = ssub.s32 %s26, %s33
      %s40 = sor.u32 %s38, %s39
      %p41 = scmp.eq.s32.totalorder %s40, 0
      %s43 = sadd.s32 %s42, 1
      %s44 = scalar_select %p41, %s42, %s43
      %p47 = pneg %p41
      %p48 = scmp.eq.s32.totalorder %s18, 3
      %p49 = por %p47, %p48
      %p50 = scmp.ne.s32.totalorder %s42, %s45
      %p51 = scmp.eq.s32.totalorder %s18, 0
      %p52 = por %p50, %p51
      %p53 = scmp.ne.s32.totalorder %s42, %s45
      %p54 = scmp.eq.s32.totalorder %s23, 3
      %p55 = por %p53, %p54
      %p56 = scmp.ne.s32.totalorder %s45, %s46
      %p57 = scmp.eq.s32.totalorder %s23, 0
      %p58 = por %p56, %p57
      %p59 = scmp.ne.s32.totalorder %s45, %s46
      %p60 = scmp.eq.s32.totalorder %s24, 3
      %p61 = por %p59, %p60
      %p63 = scmp.ne.s32.totalorder %s46, %s62
      %p64 = scmp.eq.s32.totalorder %s24, 0
      %p65 = por %p63, %p64
      %s66 = ssub.s32 %s26, %s33
      %p67 = scmp.eq.s32.totalorder %s66, 0
      %s69 = sadd.s32 %s68, 1
      %s70 = scalar_select %p67, %s68, %s69
      %p73 = pneg %p67
      %p74 = scmp.eq.s32.totalorder %s18, 3
      %p75 = por %p73, %p74
      %p76 = scmp.ne.s32.totalorder %s68, %s71
      %p77 = scmp.eq.s32.totalorder %s18, 0
      %p78 = por %p76, %p77
      %p79 = scmp.ne.s32.totalorder %s68, %s71
      %p80 = scmp.eq.s32.totalorder %s23, 3
      %p81 = por %p79, %p80
      %p82 = scmp.ne.s32.totalorder %s71, %s72
      %p83 = scmp.eq.s32.totalorder %s23, 0
      %p84 = por %p82, %p83
      %p85 = scmp.ne.s32.totalorder %s71, %s72
      %p86 = scmp.eq.s32.totalorder %s24, 3
      %p87 = por %p85, %p86
      %p89 = scmp.ne.s32.totalorder %s72, %s88
      %p90 = scmp.eq.s32.totalorder %s24, 0
      %p91 = por %p89, %p90
      %s93 = sadd.s32 %s92, 1
      %p96 = scmp.eq.s32.totalorder %s18, 3
      %p97 = scmp.ne.s32.totalorder %s92, %s94
      %p98 = scmp.eq.s32.totalorder %s18, 0
      %p99 = por %p97, %p98
      %p100 = scmp.ne.s32.totalorder %s92, %s94
      %p101 = scmp.eq.s32.totalorder %s23, 3
      %p102 = por %p100, %p101
      %p103 = scmp.ne.s32.totalorder %s94, %s95
      %p104 = scmp.eq.s32.totalorder %s23, 0
      %p105 = por %p103, %p104
      %p106 = scmp.ne.s32.totalorder %s94, %s95
      %p107 = scmp.eq.s32.totalorder %s24, 3
      %p108 = por %p106, %p107
      %p110 = scmp.ne.s32.totalorder %s95, %s109
      %p111 = scmp.eq.s32.totalorder %s24, 0
      %p112 = por %p110, %p111
      %s113 = ssub.s32 %s25, %s37
      %p114 = scmp.eq.s32.totalorder %s113, 0
      %s116 = sadd.s32 %s115, 1
      %s117 = scalar_select %p114, %s115, %s116
      %p120 = pneg %p114
      %p121 = scmp.eq.s32.totalorder %s18, 3
      %p122 = por %p120, %p121
      %p123 = scmp.ne.s32.totalorder %s115, %s118
      %p124 = scmp.eq.s32.totalorder %s18, 0
      %p125 = por %p123, %p124
      %p126 = scmp.ne.s32.totalorder %s115, %s118
      %p127 = scmp.eq.s32.totalorder %s23, 3
      %p128 = por %p126, %p127
      %p129 = scmp.ne.s32.totalorder %s118, %s119
      %p130 = scmp.eq.s32.totalorder %s23, 0
      %p131 = por %p129, %p130
      %p132 = scmp.ne.s32.totalorder %s118, %s119
      %p133 = scmp.eq.s32.totalorder %s24, 3
      %p134 = por %p132, %p133
      %p136 = scmp.ne.s32.totalorder %s119, %s135
      %p137 = scmp.eq.s32.totalorder %s24, 0
      %p138 = por %p136, %p137
      %p139 = scmp.le.s32.totalorder 1, %s18
      %p140 = scmp.lt.s32.totalorder %s18, 5
      %p141 = pnand %p139, %p140
      %p142 = pneg %p141
      // Predicated region
      $region9: #{tpu_custom_call.1} parent=5 // pred_check
        _
      $region10: #{tpu_custom_call.1} parent=5 // pred_check_branch
        %144 = sbr.rel (%p141) target = $region12
      $region11: #{tpu_custom_call.1} parent=5 // pred_region
        %s145 = ssub.s32 %s18, 1
        // Predicated region
        $region13: #{tpu_custom_call.1} parent=11 // pred_check
          %p146 = pneg %p105
        $region14: #{tpu_custom_call.1} parent=11 // pred_check_branch
          %148 = sbr.rel (%p146) target = $region16
        $region15: #{tpu_custom_call.1} parent=11 // pred_region
          %s150 = ssub.s32 1024, 1024
          %151 = vsyncadd [#allocation7], %s150
          %s152 = sshll.u32 [#allocation8], 4
          %s153 = int_to_ptr.vmem [resolvable:$true] %s152
          %158 = dma.hbm_to_vmem [thread:$0]  %s2, 1024, %s153, [#allocation7], 64, 64, 4
        $region16: #{tpu_custom_call.1} parent=11 // pred_fallthru
          _
      $region12: #{tpu_custom_call.1} parent=5 // pred_fallthru
        _
      %p159 = scmp.lt.s32.totalorder %s18, 4
      // Predicated region
      $region17: #{tpu_custom_call.1} parent=5 // pred_check
        %p160 = pneg %p159
      $region18: #{tpu_custom_call.1} parent=5 // pred_check_branch
        %162 = sbr.rel (%p160) target = $region20
      $region19: #{tpu_custom_call.1} parent=5 // pred_region
        // Predicated region
        $region21: #{tpu_custom_call.1} parent=19 // pred_check
          %p163 = pneg %p52
        $region22: #{tpu_custom_call.1} parent=19 // pred_check_branch
          %165 = sbr.rel (%p163) target = $region24
        $region23: #{tpu_custom_call.1} parent=19 // pred_region
          %s166 = sand.u32 %s42, 1
          %s167 = scalar_lea.sflag [#allocation4], %s166
          %s168 = sand.u32 %s42, 1
          %s169 = smul.addr %s168, 64
          %s170 = scalar_lea.vmem [#allocation3], %s169
          %s171 = smul.u32 16, %s25
          %s173 = ssub.s32 1024, 1024
          %174 = vsyncadd %s167, %s173
          %s175 = smul.addr %s171, 2
          %s176 = sadd.s32 %s26, %s175
          %s177 = smul.addr %s176, 64
          %s178 = scalar_lea.hbm %s0, %s177
          %s179 = sshll.u32 %s170, 4
          %s180 = int_to_ptr.vmem [resolvable:$true] %s179
          %185 = dma.hbm_to_vmem [thread:$0]  %s178, 1024, %s180, %s167, 128, 64, 4
        $region24: #{tpu_custom_call.1} parent=19 // pred_fallthru
          _
        // Predicated region
        $region25: #{tpu_custom_call.1} parent=19 // pred_check
          %p186 = pneg %p78
        $region26: #{tpu_custom_call.1} parent=19 // pred_check_branch
          %188 = sbr.rel (%p186) target = $region28
        $region27: #{tpu_custom_call.1} parent=19 // pred_region
          %s189 = sand.u32 %s18, 1
          %s190 = scalar_lea.sflag [#allocation7], %s189
          %s191 = sand.u32 %s68, 1
          %s192 = smul.addr %s191, 64
          %s193 = scalar_lea.vmem [#allocation6], %s192
          %s194 = smul.u32 16, %s26
          %s196 = ssub.s32 1024, 1024
          %197 = vsyncadd %s190, %s196
          %s198 = smul.addr %s194, 64
          %s199 = scalar_lea.hbm %s1, %s198
          %s200 = sshll.u32 %s193, 4
          %s201 = int_to_ptr.vmem [resolvable:$true] %s200
          %206 = dma.hbm_to_vmem [thread:$0]  %s199, 1024, %s201, %s190, 64, 64, 4
        $region28: #{tpu_custom_call.1} parent=19 // pred_fallthru
          _
      $region20: #{tpu_custom_call.1} parent=5 // pred_fallthru
        _
      %p207 = scmp.le.s32.totalorder 1, %s18
      %p208 = scmp.lt.s32.totalorder %s18, 5
      %p209 = pnand %p207, %p208
      %p210 = pneg %p209
      // Predicated region
      $region29: #{tpu_custom_call.1} parent=5 // pred_check
        _
      $region30: #{tpu_custom_call.1} parent=5 // pred_check_branch
        %212 = sbr.rel (%p209) target = $region32
      $region31: #{tpu_custom_call.1} parent=5 // pred_region
        %s213 = ssub.s32 %s18, 1
        %s214 = sand.u32 %s45, 1
        %s215 = scalar_lea.sflag [#allocation4], %s214
        %s216 = sand.u32 %s45, 1
        %s217 = smul.addr %s216, 64
        %s218 = scalar_lea.vmem [#allocation3], %s217
        // Predicated region
        $region33: #{tpu_custom_call.1} parent=31 // pred_check
          %p219 = pneg %p58
        $region34: #{tpu_custom_call.1} parent=31 // pred_check_branch
          %221 = sbr.rel (%p219) target = $region36
        $region35: #{tpu_custom_call.1} parent=31 // pred_region
          %222 = dma.done %s215, 1024
        $region36: #{tpu_custom_call.1} parent=31 // pred_fallthru
          _
        %s223 = sand.u32 %s23, 1
        %s224 = scalar_lea.sflag [#allocation7], %s223
        %s225 = sand.u32 %s71, 1
        %s226 = smul.addr %s225, 64
        %s227 = scalar_lea.vmem [#allocation6], %s226
        // Predicated region
        $region37: #{tpu_custom_call.1} parent=31 // pred_check
          %p228 = pneg %p84
        $region38: #{tpu_custom_call.1} parent=31 // pred_check_branch
          %230 = sbr.rel (%p228) target = $region40
        $region39: #{tpu_custom_call.1} parent=31 // pred_region
          %231 = dma.done %s224, 1024
        $region40: #{tpu_custom_call.1} parent=31 // pred_fallthru
          _
        // Predicated region
        $region41: #{tpu_custom_call.1} parent=31 // pred_check
          %p232 = pneg %p105
        $region42: #{tpu_custom_call.1} parent=31 // pred_check_branch
          %234 = sbr.rel (%p232) target = $region44
        $region43: #{tpu_custom_call.1} parent=31 // pred_region
          %235 = dma.done [#allocation7], 1024
        $region44: #{tpu_custom_call.1} parent=31 // pred_fallthru
          _
        %s236 = sand.u32 %s45, 1
        %s237 = scalar_lea.sflag [#allocation4], %s236
        %s238 = sand.u32 %s45, 1
        %s239 = smul.addr %s238, 64
        %s240 = scalar_lea.vmem [#allocation3], %s239
        %p241 = pneg %p58
        %p242 = pneg %p55
        %s243 = sand.u32 %s23, 1
        %s244 = scalar_lea.sflag [#allocation7], %s243
        %s245 = sand.u32 %s71, 1
        %s246 = smul.addr %s245, 64
        %s247 = scalar_lea.vmem [#allocation6], %s246
        %p248 = pneg %p84
        %p249 = pneg %p81
        %p250 = pneg %p105
        %p251 = pneg %p102
        %p252 = pneg %p131
        %p253 = pneg %p128
        %s254 = sand.u32 %s118, 1
        %s255 = scalar_lea.sflag [#allocation5], %s254
        %s256 = sand.u32 %s118, 1
        %s257 = smul.addr %s256, 128
        %s258 = scalar_lea.vmem [#allocation9], %s257
        %s259 = smul.u32 16, %s27
        %s260 = smul.u32 16, %s28
        %s261 = smul.u32 16, %s27
        %p263 = scmp.eq.s32.totalorder %s28, 0
        // Predicated region
        $region45: #{tpu_custom_call.1} parent=31 // pred_check
          %p264 = pneg %p263
        $region46: #{tpu_custom_call.1} parent=31 // pred_check_branch
          %266 = sbr.rel (%p264) target = $region48
        $region47: #{tpu_custom_call.1} parent=31 // pred_region
          %267 = vst [vmem:[#allocation2] sm:$0xff] 0.0
          %268 = vst [vmem:[#allocation2 + $0x8] sm:$0xff] 0.0
          %269 = vst [vmem:[#allocation2 + $0x10] sm:$0xff] 0.0
          %270 = vst [vmem:[#allocation2 + $0x18] sm:$0xff] 0.0
          %271 = vst [vmem:[#allocation2 + $0x20] sm:$0xff] 0.0
          %272 = vst [vmem:[#allocation2 + $0x28] sm:$0xff] 0.0
          %273 = vst [vmem:[#allocation2 + $0x30] sm:$0xff] 0.0
          %274 = vst [vmem:[#allocation2 + $0x38] sm:$0xff] 0.0
          %275 = vst [vmem:[#allocation2 + $0x40] sm:$0xff] 0.0
          %276 = vst [vmem:[#allocation2 + $0x48] sm:$0xff] 0.0
          %277 = vst [vmem:[#allocation2 + $0x50] sm:$0xff] 0.0
          %278 = vst [vmem:[#allocation2 + $0x58] sm:$0xff] 0.0
          %279 = vst [vmem:[#allocation2 + $0x60] sm:$0xff] 0.0
          %280 = vst [vmem:[#allocation2 + $0x68] sm:$0xff] 0.0
          %281 = vst [vmem:[#allocation2 + $0x70] sm:$0xff] 0.0
          %282 = vst [vmem:[#allocation2 + $0x78] sm:$0xff] 0.0
        $region48: #{tpu_custom_call.1} parent=31 // pred_fallthru
          _
        %v283 = vld [vmem:[%s227] sm:$0xf]
        %v284 = vld [vmem:[%s227 + $0x4] sm:$0xf]
        %v285 = vld [vmem:[%s227 + $0x8] sm:$0xf]
        %v286 = vld [vmem:[%s227 + $0xc] sm:$0xf]
        %v287 = vld [vmem:[%s227 + $0x10] sm:$0xf]
        %v288 = vld [vmem:[%s227 + $0x14] sm:$0xf]
        %v289 = vld [vmem:[%s227 + $0x18] sm:$0xf]
        %v290 = vld [vmem:[%s227 + $0x1c] sm:$0xf]
        %v291 = vld [vmem:[%s227 + $0x20] sm:$0xf]
        %v292 = vld [vmem:[%s227 + $0x24] sm:$0xf]
        %v293 = vld [vmem:[%s227 + $0x28] sm:$0xf]
        %v294 = vld [vmem:[%s227 + $0x2c] sm:$0xf]
        %v295 = vld [vmem:[%s227 + $0x30] sm:$0xf]
        %v296 = vld [vmem:[%s227 + $0x34] sm:$0xf]
        %v297 = vld [vmem:[%s227 + $0x38] sm:$0xf]
        %v298 = vld [vmem:[%s227 + $0x3c] sm:$0xf]
        %v299 = vld [vmem:[#allocation8] sm:$0xf]
        %v300 = vld [vmem:[#allocation8 + $0x4] sm:$0xf]
        %v301 = vld [vmem:[#allocation8 + $0x8] sm:$0xf]
        %v302 = vld [vmem:[#allocation8 + $0xc] sm:$0xf]
        %v303 = vld [vmem:[#allocation8 + $0x10] sm:$0xf]
        %v304 = vld [vmem:[#allocation8 + $0x14] sm:$0xf]
        %v305 = vld [vmem:[#allocation8 + $0x18] sm:$0xf]
        %v306 = vld [vmem:[#allocation8 + $0x1c] sm:$0xf]
        %v307 = vld [vmem:[#allocation8 + $0x20] sm:$0xf]
        %v308 = vld [vmem:[#allocation8 + $0x24] sm:$0xf]
        %v309 = vld [vmem:[#allocation8 + $0x28] sm:$0xf]
        %v310 = vld [vmem:[#allocation8 + $0x2c] sm:$0xf]
        %v311 = vld [vmem:[#allocation8 + $0x30] sm:$0xf]
        %v312 = vld [vmem:[#allocation8 + $0x34] sm:$0xf]
        %v313 = vld [vmem:[#allocation8 + $0x38] sm:$0xf]
        %v314 = vld [vmem:[#allocation8 + $0x3c] sm:$0xf]
        %v331 = vunpack.c.l.b16 %v283
        %v332 = vunpack.c.l.b16 %v284
        %v333 = vunpack.c.l.b16 %v285
        %v334 = vunpack.c.l.b16 %v286
        %v335 = vunpack.c.l.b16 %v287
        %v336 = vunpack.c.l.b16 %v288
        %v337 = vunpack.c.l.b16 %v289
        %v338 = vunpack.c.l.b16 %v290
        %v339 = vunpack.c.l.b16 %v291
        %v340 = vunpack.c.l.b16 %v292
        %v341 = vunpack.c.l.b16 %v293
        %v342 = vunpack.c.l.b16 %v294
        %v343 = vunpack.c.l.b16 %v295
        %v344 = vunpack.c.l.b16 %v296
        %v345 = vunpack.c.l.b16 %v297
        %v346 = vunpack.c.l.b16 %v298
        %v347 = vpack.c.b16 %v332, %v331
        %v348 = vpack.c.b16 %v334, %v333
        %v349 = vpack.c.b16 %v336, %v335
        %v350 = vpack.c.b16 %v338, %v337
        %v351 = vpack.c.b16 %v340, %v339
        %v352 = vpack.c.b16 %v342, %v341
        %v353 = vpack.c.b16 %v344, %v343
        %v354 = vpack.c.b16 %v346, %v345
        %v379 = vunpack.c.l.b16 %v299
        %v380 = vunpack.c.l.b16 %v300
        %v381 = vunpack.c.l.b16 %v301
        %v382 = vunpack.c.l.b16 %v302
        %v383 = vunpack.c.l.b16 %v303
        %v384 = vunpack.c.l.b16 %v304
        %v385 = vunpack.c.l.b16 %v305
        %v386 = vunpack.c.l.b16 %v306
        %v387 = vunpack.c.l.b16 %v307
        %v388 = vunpack.c.l.b16 %v308
        %v389 = vunpack.c.l.b16 %v309
        %v390 = vunpack.c.l.b16 %v310
        %v391 = vunpack.c.l.b16 %v311
        %v392 = vunpack.c.l.b16 %v312
        %v393 = vunpack.c.l.b16 %v313
        %v394 = vunpack.c.l.b16 %v314
        %v395 = vpack.c.b16 %v380, %v379
        %v396 = vpack.c.b16 %v382, %v381
        %v397 = vpack.c.b16 %v384, %v383
        %v398 = vpack.c.b16 %v386, %v385
        %v399 = vpack.c.b16 %v388, %v387
        %v400 = vpack.c.b16 %v390, %v389
        %v401 = vpack.c.b16 %v392, %v391
        %v402 = vpack.c.b16 %v394, %v393
        %411 = vmatprep.subr.bf16.mxu0 0
        %412 = vmatpush1.bf16.msra.mxu0 %v402
        %413 = vmatprep.subr.bf16.mxu0 0
        %414 = vmatpush1.bf16.msra.mxu0 %v401
        %415 = vmatprep.subr.bf16.mxu0 0
        %416 = vmatpush1.bf16.msra.mxu0 %v400
        %417 = vmatprep.subr.bf16.mxu0 0
        %418 = vmatpush1.bf16.msra.mxu0 %v399
        %419 = vmatprep.subr.bf16.mxu0 0
        %420 = vmatpush1.bf16.msra.mxu0 %v398
        %421 = vmatprep.subr.bf16.mxu0 0
        %422 = vmatpush1.bf16.msra.mxu0 %v397
        %423 = vmatprep.subr.bf16.mxu0 0
        %424 = vmatpush1.bf16.msra.mxu0 %v396
        %425 = vmatprep.subr.bf16.mxu0 0
        %426 = vmatpush1.bf16.msra.mxu0 %v395
        %427 = vmatprep.subr.bf16.mxu0 0
        %428 = vmatpush2.bf16.msra.mxu0 0
        %429 = vmatprep.subr.bf16.mxu0 0
        %430 = vmatpush2.bf16.msra.mxu0 0
        %431 = vmatprep.subr.bf16.mxu0 0
        %432 = vmatpush2.bf16.msra.mxu0 0
        %433 = vmatprep.subr.bf16.mxu0 0
        %434 = vmatpush2.bf16.msra.mxu0 0
        %435 = vmatprep.subr.bf16.mxu0 0
        %436 = vmatpush2.bf16.msra.mxu0 0
        %437 = vmatprep.subr.bf16.mxu0 0
        %438 = vmatpush2.bf16.msra.mxu0 0
        %439 = vmatprep.subr.bf16.mxu0 0
        %440 = vmatpush2.bf16.msra.mxu0 0
        %441 = vmatprep.subr.bf16.mxu0 0
        %442 = vmatpush2.bf16.msra.mxu0 0
        %443 = vmatprep.mubr.bf16.mxu0 0
        %444 = vmatmul.mubr.bf16.gmra.mxu0 %v347
        %v445 = vpop.f32.mrf.mxu0
        %v446 = vadd.f32 0.0, %v445
        %v447 = vpop.f32.mrf.mxu0
        %v448 = vpop.f32.mrf.mxu0
        %v449 = vadd.f32 0.0, %v448
        %v450 = vpop.f32.mrf.mxu0
        %451 = vmatprep.mubr.bf16.mxu0 0
        %452 = vmatmul.mubr.bf16.gmra.mxu0 %v348
        %v453 = vpop.f32.mrf.mxu0
        %v454 = vadd.f32 0.0, %v453
        %v455 = vpop.f32.mrf.mxu0
        %v456 = vpop.f32.mrf.mxu0
        %v457 = vadd.f32 0.0, %v456
        %v458 = vpop.f32.mrf.mxu0
        %459 = vmatprep.mubr.bf16.mxu0 0
        %460 = vmatmul.mubr.bf16.gmra.mxu0 %v349
        %v461 = vpop.f32.mrf.mxu0
        %v462 = vadd.f32 0.0, %v461
        %v463 = vpop.f32.mrf.mxu0
        %v464 = vpop.f32.mrf.mxu0
        %v465 = vadd.f32 0.0, %v464
        %v466 = vpop.f32.mrf.mxu0
        %467 = vmatprep.mubr.bf16.mxu0 0
        %468 = vmatmul.mubr.bf16.gmra.mxu0 %v350
        %v469 = vpop.f32.mrf.mxu0
        %v470 = vadd.f32 0.0, %v469
        %v471 = vpop.f32.mrf.mxu0
        %v472 = vpop.f32.mrf.mxu0
        %v473 = vadd.f32 0.0, %v472
        %v474 = vpop.f32.mrf.mxu0
        %475 = vmatprep.mubr.bf16.mxu0 0
        %476 = vmatmul.mubr.bf16.gmra.mxu0 %v351
        %v477 = vpop.f32.mrf.mxu0
        %v478 = vadd.f32 0.0, %v477
        %v479 = vpop.f32.mrf.mxu0
        %v480 = vpop.f32.mrf.mxu0
        %v481 = vadd.f32 0.0, %v480
        %v482 = vpop.f32.mrf.mxu0
        %483 = vmatprep.mubr.bf16.mxu0 0
        %484 = vmatmul.mubr.bf16.gmra.mxu0 %v352
        %v485 = vpop.f32.mrf.mxu0
        %v486 = vadd.f32 0.0, %v485
        %v487 = vpop.f32.mrf.mxu0
        %v488 = vpop.f32.mrf.mxu0
        %v489 = vadd.f32 0.0, %v488
        %v490 = vpop.f32.mrf.mxu0
        %491 = vmatprep.mubr.bf16.mxu0 0
        %492 = vmatmul.mubr.bf16.gmra.mxu0 %v353
        %v493 = vpop.f32.mrf.mxu0
        %v494 = vadd.f32 0.0, %v493
        %v495 = vpop.f32.mrf.mxu0
        %v496 = vpop.f32.mrf.mxu0
        %v497 = vadd.f32 0.0, %v496
        %v498 = vpop.f32.mrf.mxu0
        %499 = vmatprep.mubr.bf16.mxu0 0
        %500 = vmatmul.mubr.bf16.gmra.mxu0 %v354
        %v501 = vpop.f32.mrf.mxu0
        %v502 = vadd.f32 0.0, %v501
        %v503 = vpop.f32.mrf.mxu0
        %v504 = vpop.f32.mrf.mxu0
        %v505 = vadd.f32 0.0, %v504
        %v506 = vpop.f32.mrf.mxu0
        %507 = vdwg.mxu0
        %v508 = vld [vmem:[#allocation2] sm:$0xff]
        %v509 = vld [vmem:[#allocation2 + $0x8] sm:$0xff]
        %v510 = vld [vmem:[#allocation2 + $0x10] sm:$0xff]
        %v511 = vld [vmem:[#allocation2 + $0x18] sm:$0xff]
        %v512 = vld [vmem:[#allocation2 + $0x20] sm:$0xff]
        %v513 = vld [vmem:[#allocation2 + $0x28] sm:$0xff]
        %v514 = vld [vmem:[#allocation2 + $0x30] sm:$0xff]
        %v515 = vld [vmem:[#allocation2 + $0x38] sm:$0xff]
        %v516 = vld [vmem:[#allocation2 + $0x40] sm:$0xff]
        %v517 = vld [vmem:[#allocation2 + $0x48] sm:$0xff]
        %v518 = vld [vmem:[#allocation2 + $0x50] sm:$0xff]
        %v519 = vld [vmem:[#allocation2 + $0x58] sm:$0xff]
        %v520 = vld [vmem:[#allocation2 + $0x60] sm:$0xff]
        %v521 = vld [vmem:[#allocation2 + $0x68] sm:$0xff]
        %v522 = vld [vmem:[#allocation2 + $0x70] sm:$0xff]
        %v523 = vld [vmem:[#allocation2 + $0x78] sm:$0xff]
        %v524 = vld [vmem:[%s218] sm:$0xf]
        %v525 = vld [vmem:[%s218 + $0x4] sm:$0xf]
        %v526 = vld [vmem:[%s218 + $0x8] sm:$0xf]
        %v527 = vld [vmem:[%s218 + $0xc] sm:$0xf]
        %v528 = vld [vmem:[%s218 + $0x10] sm:$0xf]
        %v529 = vld [vmem:[%s218 + $0x14] sm:$0xf]
        %v530 = vld [vmem:[%s218 + $0x18] sm:$0xf]
        %v531 = vld [vmem:[%s218 + $0x1c] sm:$0xf]
        %v532 = vld [vmem:[%s218 + $0x20] sm:$0xf]
        %v533 = vld [vmem:[%s218 + $0x24] sm:$0xf]
        %v534 = vld [vmem:[%s218 + $0x28] sm:$0xf]
        %v535 = vld [vmem:[%s218 + $0x2c] sm:$0xf]
        %v536 = vld [vmem:[%s218 + $0x30] sm:$0xf]
        %v537 = vld [vmem:[%s218 + $0x34] sm:$0xf]
        %v538 = vld [vmem:[%s218 + $0x38] sm:$0xf]
        %v539 = vld [vmem:[%s218 + $0x3c] sm:$0xf]
        %v540 = vpack.c.bf16 %v449, %v446
        %v541 = vpack.c.bf16 %v457, %v454
        %v542 = vpack.c.bf16 %v465, %v462
        %v543 = vpack.c.bf16 %v473, %v470
        %v544 = vpack.c.bf16 %v481, %v478
        %v545 = vpack.c.bf16 %v489, %v486
        %v546 = vpack.c.bf16 %v497, %v494
        %v547 = vpack.c.bf16 %v505, %v502
        %v564 = vunpack.c.l.b16 %v524
        %v565 = vunpack.c.l.b16 %v525
        %v566 = vunpack.c.l.b16 %v526
        %v567 = vunpack.c.l.b16 %v527
        %v568 = vunpack.c.l.b16 %v528
        %v569 = vunpack.c.l.b16 %v529
        %v570 = vunpack.c.l.b16 %v530
        %v571 = vunpack.c.l.b16 %v531
        %v572 = vunpack.c.l.b16 %v532
        %v573 = vunpack.c.l.b16 %v533
        %v574 = vunpack.c.l.b16 %v534
        %v575 = vunpack.c.l.b16 %v535
        %v576 = vunpack.c.l.b16 %v536
        %v577 = vunpack.c.l.b16 %v537
        %v578 = vunpack.c.l.b16 %v538
        %v579 = vunpack.c.l.b16 %v539
        %v580 = vpack.c.b16 %v565, %v564
        %v581 = vpack.c.b16 %v567, %v566
        %v582 = vpack.c.b16 %v569, %v568
        %v583 = vpack.c.b16 %v571, %v570
        %v584 = vpack.c.b16 %v573, %v572
        %v585 = vpack.c.b16 %v575, %v574
        %v586 = vpack.c.b16 %v577, %v576
        %v587 = vpack.c.b16 %v579, %v578
        %596 = vmatprep.subr.bf16.mxu0 0
        %597 = vmatpush1.bf16.msra.mxu0 %v547
        %598 = vmatprep.subr.bf16.mxu0 0
        %599 = vmatpush1.bf16.msra.mxu0 %v546
        %600 = vmatprep.subr.bf16.mxu0 0
        %601 = vmatpush1.bf16.msra.mxu0 %v545
        %602 = vmatprep.subr.bf16.mxu0 0
        %603 = vmatpush1.bf16.msra.mxu0 %v544
        %604 = vmatprep.subr.bf16.mxu0 0
        %605 = vmatpush1.bf16.msra.mxu0 %v543
        %606 = vmatprep.subr.bf16.mxu0 0
        %607 = vmatpush1.bf16.msra.mxu0 %v542
        %608 = vmatprep.subr.bf16.mxu0 0
        %609 = vmatpush1.bf16.msra.mxu0 %v541
        %610 = vmatprep.subr.bf16.mxu0 0
        %611 = vmatpush1.bf16.msra.mxu0 %v540
        %612 = vmatprep.subr.bf16.mxu0 0
        %613 = vmatpush2.bf16.msra.mxu0 0
        %614 = vmatprep.subr.bf16.mxu0 0
        %615 = vmatpush2.bf16.msra.mxu0 0
        %616 = vmatprep.subr.bf16.mxu0 0
        %617 = vmatpush2.bf16.msra.mxu0 0
        %618 = vmatprep.subr.bf16.mxu0 0
        %619 = vmatpush2.bf16.msra.mxu0 0
        %620 = vmatprep.subr.bf16.mxu0 0
        %621 = vmatpush2.bf16.msra.mxu0 0
        %622 = vmatprep.subr.bf16.mxu0 0
        %623 = vmatpush2.bf16.msra.mxu0 0
        %624 = vmatprep.subr.bf16.mxu0 0
        %625 = vmatpush2.bf16.msra.mxu0 0
        %626 = vmatprep.subr.bf16.mxu0 0
        %627 = vmatpush2.bf16.msra.mxu0 0
        %628 = vmatprep.mubr.bf16.mxu0 0
        %629 = vmatmul.mubr.bf16.gmra.mxu0 %v580
        %v630 = vpop.f32.mrf.mxu0
        %v631 = vadd.f32 0.0, %v630
        %v632 = vpop.f32.mrf.mxu0
        %v633 = vpop.f32.mrf.mxu0
        %v634 = vadd.f32 0.0, %v633
        %v635 = vpop.f32.mrf.mxu0
        %636 = vmatprep.mubr.bf16.mxu0 0
        %637 = vmatmul.mubr.bf16.gmra.mxu0 %v581
        %v638 = vpop.f32.mrf.mxu0
        %v639 = vadd.f32 0.0, %v638
        %v640 = vpop.f32.mrf.mxu0
        %v641 = vpop.f32.mrf.mxu0
        %v642 = vadd.f32 0.0, %v641
        %v643 = vpop.f32.mrf.mxu0
        %644 = vmatprep.mubr.bf16.mxu0 0
        %645 = vmatmul.mubr.bf16.gmra.mxu0 %v582
        %v646 = vpop.f32.mrf.mxu0
        %v647 = vadd.f32 0.0, %v646
        %v648 = vpop.f32.mrf.mxu0
        %v649 = vpop.f32.mrf.mxu0
        %v650 = vadd.f32 0.0, %v649
        %v651 = vpop.f32.mrf.mxu0
        %652 = vmatprep.mubr.bf16.mxu0 0
        %653 = vmatmul.mubr.bf16.gmra.mxu0 %v583
        %v654 = vpop.f32.mrf.mxu0
        %v655 = vadd.f32 0.0, %v654
        %v656 = vpop.f32.mrf.mxu0
        %v657 = vpop.f32.mrf.mxu0
        %v658 = vadd.f32 0.0, %v657
        %v659 = vpop.f32.mrf.mxu0
        %660 = vmatprep.mubr.bf16.mxu0 0
        %661 = vmatmul.mubr.bf16.gmra.mxu0 %v584
        %v662 = vpop.f32.mrf.mxu0
        %v663 = vadd.f32 0.0, %v662
        %v664 = vpop.f32.mrf.mxu0
        %v665 = vpop.f32.mrf.mxu0
        %v666 = vadd.f32 0.0, %v665
        %v667 = vpop.f32.mrf.mxu0
        %668 = vmatprep.mubr.bf16.mxu0 0
        %669 = vmatmul.mubr.bf16.gmra.mxu0 %v585
        %v670 = vpop.f32.mrf.mxu0
        %v671 = vadd.f32 0.0, %v670
        %v672 = vpop.f32.mrf.mxu0
        %v673 = vpop.f32.mrf.mxu0
        %v674 = vadd.f32 0.0, %v673
        %v675 = vpop.f32.mrf.mxu0
        %676 = vmatprep.mubr.bf16.mxu0 0
        %677 = vmatmul.mubr.bf16.gmra.mxu0 %v586
        %v678 = vpop.f32.mrf.mxu0
        %v679 = vadd.f32 0.0, %v678
        %v680 = vpop.f32.mrf.mxu0
        %v681 = vpop.f32.mrf.mxu0
        %v682 = vadd.f32 0.0, %v681
        %v683 = vpop.f32.mrf.mxu0
        %684 = vmatprep.mubr.bf16.mxu0 0
        %685 = vmatmul.mubr.bf16.gmra.mxu0 %v587
        %v686 = vpop.f32.mrf.mxu0
        %v687 = vadd.f32 0.0, %v686
        %v688 = vpop.f32.mrf.mxu0
        %v689 = vpop.f32.mrf.mxu0
        %v690 = vadd.f32 0.0, %v689
        %v691 = vpop.f32.mrf.mxu0
        %692 = vdwg.mxu0
        %v693 = vadd.f32 %v508, %v631
        %v694 = vadd.f32 %v509, %v634
        %v695 = vadd.f32 %v510, %v639
        %v696 = vadd.f32 %v511, %v642
        %v697 = vadd.f32 %v512, %v647
        %v698 = vadd.f32 %v513, %v650
        %v699 = vadd.f32 %v514, %v655
        %v700 = vadd.f32 %v515, %v658
        %v701 = vadd.f32 %v516, %v663
        %v702 = vadd.f32 %v517, %v666
        %v703 = vadd.f32 %v518, %v671
        %v704 = vadd.f32 %v519, %v674
        %v705 = vadd.f32 %v520, %v679
        %v706 = vadd.f32 %v521, %v682
        %v707 = vadd.f32 %v522, %v687
        %v708 = vadd.f32 %v523, %v690
        %709 = vst [vmem:[#allocation2] sm:$0xff] %v693
        %710 = vst [vmem:[#allocation2 + $0x8] sm:$0xff] %v694
        %711 = vst [vmem:[#allocation2 + $0x10] sm:$0xff] %v695
        %712 = vst [vmem:[#allocation2 + $0x18] sm:$0xff] %v696
        %713 = vst [vmem:[#allocation2 + $0x20] sm:$0xff] %v697
        %714 = vst [vmem:[#allocation2 + $0x28] sm:$0xff] %v698
        %715 = vst [vmem:[#allocation2 + $0x30] sm:$0xff] %v699
        %716 = vst [vmem:[#allocation2 + $0x38] sm:$0xff] %v700
        %717 = vst [vmem:[#allocation2 + $0x40] sm:$0xff] %v701
        %718 = vst [vmem:[#allocation2 + $0x48] sm:$0xff] %v702
        %719 = vst [vmem:[#allocation2 + $0x50] sm:$0xff] %v703
        %720 = vst [vmem:[#allocation2 + $0x58] sm:$0xff] %v704
        %721 = vst [vmem:[#allocation2 + $0x60] sm:$0xff] %v705
        %722 = vst [vmem:[#allocation2 + $0x68] sm:$0xff] %v706
        %723 = vst [vmem:[#allocation2 + $0x70] sm:$0xff] %v707
        %724 = vst [vmem:[#allocation2 + $0x78] sm:$0xff] %v708
        %p725 = scmp.eq.s32.totalorder %s28, 1
        // Predicated region
        $region49: #{tpu_custom_call.1} parent=31 // pred_check
          %p726 = pneg %p725
        $region50: #{tpu_custom_call.1} parent=31 // pred_check_branch
          %728 = sbr.rel (%p726) target = $region52
        $region51: #{tpu_custom_call.1} parent=31 // pred_region
          %v729 = vld [vmem:[#allocation2] sm:$0xff]
          %v730 = vld [vmem:[#allocation2 + $0x8] sm:$0xff]
          %v731 = vld [vmem:[#allocation2 + $0x10] sm:$0xff]
          %v732 = vld [vmem:[#allocation2 + $0x18] sm:$0xff]
          %v733 = vld [vmem:[#allocation2 + $0x20] sm:$0xff]
          %v734 = vld [vmem:[#allocation2 + $0x28] sm:$0xff]
          %v735 = vld [vmem:[#allocation2 + $0x30] sm:$0xff]
          %v736 = vld [vmem:[#allocation2 + $0x38] sm:$0xff]
          %v737 = vld [vmem:[#allocation2 + $0x40] sm:$0xff]
          %v738 = vld [vmem:[#allocation2 + $0x48] sm:$0xff]
          %v739 = vld [vmem:[#allocation2 + $0x50] sm:$0xff]
          %v740 = vld [vmem:[#allocation2 + $0x58] sm:$0xff]
          %v741 = vld [vmem:[#allocation2 + $0x60] sm:$0xff]
          %v742 = vld [vmem:[#allocation2 + $0x68] sm:$0xff]
          %v743 = vld [vmem:[#allocation2 + $0x70] sm:$0xff]
          %v744 = vld [vmem:[#allocation2 + $0x78] sm:$0xff]
          %v745 = vmax.f32 %v729, 0.0
          %v746 = vmax.f32 %v730, 0.0
          %v747 = vmax.f32 %v731, 0.0
          %v748 = vmax.f32 %v732, 0.0
          %v749 = vmax.f32 %v733, 0.0
          %v750 = vmax.f32 %v734, 0.0
          %v751 = vmax.f32 %v735, 0.0
          %v752 = vmax.f32 %v736, 0.0
          %v753 = vmax.f32 %v737, 0.0
          %v754 = vmax.f32 %v738, 0.0
          %v755 = vmax.f32 %v739, 0.0
          %v756 = vmax.f32 %v740, 0.0
          %v757 = vmax.f32 %v741, 0.0
          %v758 = vmax.f32 %v742, 0.0
          %v759 = vmax.f32 %v743, 0.0
          %v760 = vmax.f32 %v744, 0.0
          %761 = vst [vmem:[%s258] sm:$0xff] %v745
          %762 = vst [vmem:[%s258 + $0x8] sm:$0xff] %v746
          %763 = vst [vmem:[%s258 + $0x10] sm:$0xff] %v747
          %764 = vst [vmem:[%s258 + $0x18] sm:$0xff] %v748
          %765 = vst [vmem:[%s258 + $0x20] sm:$0xff] %v749
          %766 = vst [vmem:[%s258 + $0x28] sm:$0xff] %v750
          %767 = vst [vmem:[%s258 + $0x30] sm:$0xff] %v751
          %768 = vst [vmem:[%s258 + $0x38] sm:$0xff] %v752
          %769 = vst [vmem:[%s258 + $0x40] sm:$0xff] %v753
          %770 = vst [vmem:[%s258 + $0x48] sm:$0xff] %v754
          %771 = vst [vmem:[%s258 + $0x50] sm:$0xff] %v755
          %772 = vst [vmem:[%s258 + $0x58] sm:$0xff] %v756
          %773 = vst [vmem:[%s258 + $0x60] sm:$0xff] %v757
          %774 = vst [vmem:[%s258 + $0x68] sm:$0xff] %v758
          %775 = vst [vmem:[%s258 + $0x70] sm:$0xff] %v759
          %776 = vst [vmem:[%s258 + $0x78] sm:$0xff] %v760
        $region52: #{tpu_custom_call.1} parent=31 // pred_fallthru
          _
        %s777 = sand.u32 %s118, 1
        %s778 = scalar_lea.sflag [#allocation5], %s777
        %s779 = sand.u32 %s118, 1
        %s780 = smul.addr %s779, 128
        %s781 = scalar_lea.vmem [#allocation9], %s780
        // Predicated region
        $region53: #{tpu_custom_call.1} parent=31 // pred_check
          %p782 = pneg %p128
        $region54: #{tpu_custom_call.1} parent=31 // pred_check_branch
          %784 = sbr.rel (%p782) target = $region56
        $region55: #{tpu_custom_call.1} parent=31 // pred_region
          %s785 = smul.u32 16, %s27
          %s787 = ssub.s32 2048, 2048
          %788 = vsyncadd %s778, %s787
          %s789 = smul.addr %s785, 128
          %s790 = scalar_lea.hbm %s3, %s789
          %s791 = sshll.u32 %s781, 4
          %s792 = int_to_ptr.vmem [resolvable:$true] %s791
          %797 = dma.vmem_to_hbm [thread:$0]  %s792, 2048, %s790, %s778, 128, 128, 8
        $region56: #{tpu_custom_call.1} parent=31 // pred_fallthru
          _
      $region32: #{tpu_custom_call.1} parent=5 // pred_fallthru
        _
      %p798 = scmp.le.s32.totalorder 2, %s18
      // Predicated region
      $region57: #{tpu_custom_call.1} parent=5 // pred_check
        %p799 = pneg %p798
      $region58: #{tpu_custom_call.1} parent=5 // pred_check_branch
        %801 = sbr.rel (%p799) target = $region60
      $region59: #{tpu_custom_call.1} parent=5 // pred_region
        %s802 = ssub.s32 %s18, 2
        // Predicated region
        $region61: #{tpu_custom_call.1} parent=59 // pred_check
          %p803 = pneg %p134
        $region62: #{tpu_custom_call.1} parent=59 // pred_check_branch
          %805 = sbr.rel (%p803) target = $region64
        $region63: #{tpu_custom_call.1} parent=59 // pred_region
          %s806 = sand.u32 %s119, 1
          %s807 = scalar_lea.sflag [#allocation5], %s806
          %s808 = sand.u32 %s119, 1
          %s809 = smul.addr %s808, 128
          %s810 = scalar_lea.vmem [#allocation9], %s809
          %811 = dma.done %s807, 2048
        $region64: #{tpu_custom_call.1} parent=59 // pred_fallthru
          _
      $region60: #{tpu_custom_call.1} parent=5 // pred_fallthru
        _
    $region6: #{tpu_custom_call.1} parent=1 // loop_footer
      %s22 = sadd.s32 1, %s18
    $region7: #{tpu_custom_call.1} parent=1 // loop_footer_branch
      %17 = sbr.rel target = $region3
    $region8: #{tpu_custom_call.1} parent=1 // loop_exit
      _
    %812 = vsyncpa [#allocation4], 1
    %s813 = scalar_lea.sflag [#allocation4], 1
    %814 = vsyncpa %s813, 1
    %815 = vsyncpa [#allocation7], 1
    %s816 = scalar_lea.sflag [#allocation7], 1
    %817 = vsyncpa %s816, 1
    %818 = vsyncpa [#allocation5], 1
    %s819 = scalar_lea.sflag [#allocation5], 1
    %820 = vsyncpa %s819, 1

</llo_original>
